<compile_context>
chip_gen: v5e
topology: v5e:2x2
jax: 0.10.0
libtpu: 0.0.40
codegen_flags: <defaults>
</compile_context>

<pallas_src>
import functools
import math

import jax
import jax.numpy as jnp
from jax.experimental import pallas as pl
from jax.experimental.pallas import tpu as pltpu


def _build_pe(max_len: int, dim: int) -> jnp.ndarray:
    """Deterministic sinusoidal positional-encoding table, shape (max_len, dim)."""
    position = jnp.arange(0, max_len, dtype=jnp.float32)[:, None]          # (max_len, 1)
    div_term = jnp.exp(
        jnp.arange(0, dim, 2, dtype=jnp.float32) * -(math.log(10000.0) / dim)
    )                                                                       # (dim/2,)
    angles = position * div_term                                            # (max_len, dim/2)
    pe = jnp.zeros((max_len, dim), dtype=jnp.float32)
    pe = pe.at[:, 0::2].set(jnp.sin(angles))
    pe = pe.at[:, 1::2].set(jnp.cos(angles))
    return pe


def _round_up(x: int, m: int) -> int:
    return ((x + m - 1) // m) * m


def _choose_block_rows(seq_len: int, row_bytes: int, target_bytes: int = 1 << 20) -> int:
    """Pick TS (sequence positions per grid step): ~1 MiB emb tile, multiple of 8."""
    ts = max(8, (target_bytes // max(row_bytes, 1)) // 8 * 8)
    if seq_len > 8:
        # Keep >= 2 grid steps so v7x can shard the "parallel" seq axis
        # across its 2 TensorCores.
        ts = min(ts, _round_up(pl.cdiv(seq_len, 2), 8))
    ts = min(ts, _round_up(seq_len, 8))
    return ts


def _tile_lanes(pe_tile: jnp.ndarray, batch: int) -> jnp.ndarray:
    """Replicate a (rows, D) pe tile along the lane axis -> (rows, batch*D)."""
    if batch == 1:
        return pe_tile
    return jnp.concatenate([pe_tile] * batch, axis=-1)


def _pe_seq_kernel(emb_ref, pe_ref, out_ref, *, scale, batch):
    # emb_ref/out_ref: (TS, B*D) slab; pe_ref: (TS, D) rows of the pe table.
    e = emb_ref[...].astype(jnp.float32)
    p = _tile_lanes(pe_ref[...], batch)                 # (TS, B*D)
    out_ref[...] = (e * scale + p).astype(out_ref.dtype)


def _pe_step_kernel(step_ref, emb_ref, pe_ref, out_ref, *, scale, batch):
    # step_ref is consumed by the pe BlockSpec index_map (scalar prefetch).
    del step_ref
    e = emb_ref[...].astype(jnp.float32)                # (TS, B*D)
    p = _tile_lanes(pe_ref[...], batch)                 # (1, B*D) -> broadcast over TS
    out_ref[...] = (e * scale + p).astype(out_ref.dtype)


def positional_encoding(emb: jnp.ndarray,
                        pe: jnp.ndarray,
                        step: int | None = None) -> jnp.ndarray:
    """emb: (seq_len, batch, dim); pe: (max_len, dim) float32 table."""
    S, B, D = emb.shape
    BD = B * D
    scale = float(math.sqrt(D))

    # Free, contiguous reshape -> lane-dense 2-D slab (no transpose, no copy).
    emb2 = emb.reshape(S, BD)

    row_bytes = BD * jnp.dtype(emb.dtype).itemsize
    ts = _choose_block_rows(S, row_bytes)
    grid = (pl.cdiv(S, ts),)

    compiler_params = pltpu.CompilerParams(dimension_semantics=("parallel",))
    out_shape = jax.ShapeDtypeStruct((S, BD), emb.dtype)

    if step is None:
        out2 = pl.pallas_call(
            functools.partial(_pe_seq_kernel, scale=scale, batch=B),
            out_shape=out_shape,
            grid_spec=pltpu.PrefetchScalarGridSpec(
                num_scalar_prefetch=0,
                grid=grid,
                in_specs=[
                    pl.BlockSpec((ts, BD), lambda i: (i, 0)),   # emb slab
                    pl.BlockSpec((ts, D), lambda i: (i, 0)),    # pe rows (full table)
                ],
                out_specs=pl.BlockSpec((ts, BD), lambda i: (i, 0)),
            ),
            compiler_params=compiler_params,
        )(emb2, pe)
    else:
        # Stepwise decoding: the single pe row is selected via scalar prefetch,
        # so only D floats of the table are read from HBM.
        step_arr = jnp.asarray([step], dtype=jnp.int32)
        out2 = pl.pallas_call(
            functools.partial(_pe_step_kernel, scale=scale, batch=B),
            out_shape=out_shape,
            grid_spec=pltpu.PrefetchScalarGridSpec(
                num_scalar_prefetch=1,
                grid=grid,
                in_specs=[
                    pl.BlockSpec((ts, BD), lambda i, step_ref: (i, 0)),
                    pl.BlockSpec((1, D), lambda i, step_ref: (step_ref[0], 0)),
                ],
                out_specs=pl.BlockSpec((ts, BD), lambda i, step_ref: (i, 0)),
            ),
            compiler_params=compiler_params,
        )(step_arr, emb2, pe)

    return out2.reshape(S, B, D)


if __name__ == "__main__":
    SEQ, BATCH, DIM, MAX_LEN = 8, 2, 32, 200

    key = jax.random.PRNGKey(0)
    emb = jax.random.normal(key, (SEQ, BATCH, DIM), dtype=jnp.float32)

    pe = _build_pe(MAX_LEN, DIM)

    # step=None path
    out = positional_encoding(emb, pe, step=None)
    out = jax.block_until_ready(out)
    ref = emb * math.sqrt(DIM) + pe[:SEQ][:, None, :]
    assert jnp.allclose(out, ref, atol=1e-5), "step=None mismatch"

    # step path (stepwise decoding), seq_len = 1
    emb1 = emb[:1]
    out1 = positional_encoding(emb1, pe, step=5)
    out1 = jax.block_until_ready(out1)
    ref1 = emb1 * math.sqrt(DIM) + pe[5][None, None, :]
    assert jnp.allclose(out1, ref1, atol=1e-5), "step mismatch"

    print("KERNEL_OK")
</pallas_src>

<mosaic_0001>
module attributes {stable_mosaic.version = 11 : i64} {
  func.func @_pe_seq_kernel(%arg0: i32, %arg1: memref<8x64xf32, #tpu.memory_space<vmem>>, %arg2: memref<8x32xf32, #tpu.memory_space<vmem>>, %arg3: memref<8x64xf32, #tpu.memory_space<vmem>>) attributes {dimension_semantics = [#tpu.dimension_semantics<parallel>], iteration_bounds = array<i64: 1>, scalar_prefetch = 0 : i64, scratch_operands = 0 : i64, tpu.core_type = #tpu.core_type<tc>, window_params = [{transform_indices = @transform_0, window_bounds = array<i64: 8, 64>}, {transform_indices = @transform_1, window_bounds = array<i64: 8, 32>}, {transform_indices = @transform_2, window_bounds = array<i64: 8, 64>}]} {
    %c0 = arith.constant 0 : index
    %c0_0 = arith.constant 0 : index
    %0 = vector.load %arg1[%c0, %c0_0] : memref<8x64xf32, #tpu.memory_space<vmem>>, vector<8x64xf32>
    %c0_1 = arith.constant 0 : index
    %c0_2 = arith.constant 0 : index
    %1 = vector.load %arg2[%c0_1, %c0_2] : memref<8x32xf32, #tpu.memory_space<vmem>>, vector<8x32xf32>
    %2 = tpu.concatenate %1, %1 in 1 : vector<8x32xf32>, vector<8x32xf32> -> vector<8x64xf32>
    %cst = arith.constant 5.65685415 : f32
    %3 = vector.broadcast %cst : f32 to vector<8x64xf32>
    %4 = arith.mulf %0, %3 : vector<8x64xf32>
    %5 = arith.addf %4, %2 : vector<8x64xf32>
    %c0_3 = arith.constant 0 : index
    %c0_4 = arith.constant 0 : index
    %6 = vector.load %arg3[%c0_3, %c0_4] : memref<8x64xf32, #tpu.memory_space<vmem>>, vector<8x64xf32>
    tpu.vector_store %arg3[%c0_3, %c0_4], %5 {strides = array<i32>} : memref<8x64xf32, #tpu.memory_space<vmem>>, vector<8x64xf32>,
    return
  }
  func.func @transform_0(%arg0: i32) -> (i32, i32) {
    %c0_i32 = arith.constant 0 : i32
    %c0_i32_0 = arith.constant 0 : i32
    return %arg0, %c0_i32 : i32, i32
  }
  func.func @transform_1(%arg0: i32) -> (i32, i32) {
    %c0_i32 = arith.constant 0 : i32
    %c0_i32_0 = arith.constant 0 : i32
    return %arg0, %c0_i32 : i32, i32
  }
  func.func @transform_2(%arg0: i32) -> (i32, i32) {
    %c0_i32 = arith.constant 0 : i32
    %c0_i32_0 = arith.constant 0 : i32
    return %arg0, %c0_i32 : i32, i32
  }
}

</mosaic_0001>

<llo_original>
// kernel: tpu_custom_call.1
$region0: #{tpu_custom_call.1}
  #allocation0 [shape = 'u32[]', space=smem, size = 0x4, offset = 0x4, fixed_abs, tag = 'smem constant byte address 0x4 - core index']
  #allocation1 [shape = 'u32[72,128]{1,0:T(1,128)}', space=vmem, size = 0x9000, scoped, tag = 'internal scratch']
  %s0 = inlined_call_operand.vmem [shape: f32[8,64], index: 0, kind: input, shape index: {}]
  %s1 = inlined_call_operand.vmem [shape: f32[200,32], index: 1, kind: input, shape index: {}]
  %s2 = inlined_call_operand.hbm [shape: f32[8,64], index: 2, kind: output, shape index: {}]
  %s3 = sld [smem:[#allocation0]]
  $region18: #{tpu_custom_call.1} parent=0
    _
  %s5 = ssub.s32 1, %s3
  %s6 = scalar_select 0, %s5, %s3
  $region1: #{tpu_custom_call.1} parent=0
    #allocation2 [shape = 'u8[4096]{0}', space=vmem, size = 0x1000, scoped, tag = 'output window, operand 0, single buffered']
    #allocation3 [shape = 's32[1]{0}', space=sflag, size = 0x4, scoped, tag = 'scoped memory for tpu_custom_call.1']
    %7 = vsyncpa [#allocation3], 0
    // Predicated region
    $region2: #{tpu_custom_call.1} parent=1 // pred_check
      _
    $region3: #{tpu_custom_call.1} parent=1 // pred_check_branch
      %9 = sbr.rel (0) target = $region5
    $region4: #{tpu_custom_call.1} parent=1 // pred_region
      _
    $region5: #{tpu_custom_call.1} parent=1 // pred_fallthru
      _
    // Predicated region
    $region6: #{tpu_custom_call.1} parent=1 // pred_check
      _
    $region7: #{tpu_custom_call.1} parent=1 // pred_check_branch
      %11 = sbr.rel (0) target = $region9
    $region8: #{tpu_custom_call.1} parent=1 // pred_region
      _
    $region9: #{tpu_custom_call.1} parent=1 // pred_fallthru
      _
    %v12 = vld [vmem:[%s0] sm:$0xff]
    %v13 = vld [vmem:[%s1] sm:$0xff]
    %15 = vrot.lane.b32.xlu0 %v13, 32
    %v16 = vpop.permute.xlu0 %15
    %vm18 = vcmask 261120
    %v19 = vsel %vm18, %v13, %v16
    %v20 = vmul.f32 %v12, 5.656854
    %v21 = vadd.f32 %v20, %v19
    %vm22 = vcmask 523264
    %23 = vst.msk [vmem:[#allocation2] sm:$0xff] %vm22, %v21
    // Predicated region
    $region10: #{tpu_custom_call.1} parent=1 // pred_check
      _
    $region11: #{tpu_custom_call.1} parent=1 // pred_check_branch
      %25 = sbr.rel (0) target = $region13
    $region12: #{tpu_custom_call.1} parent=1 // pred_region
      %27 = vsyncadd [#allocation3], 0
      %s29 = sshll.u32 [#allocation2], 4
      %s30 = int_to_ptr.vmem [resolvable:$true] %s29
      %s31 = sshll.u32 %s2, 4
      %s32 = int_to_ptr.hbm [resolvable:$true] %s31
      %34 = dma.vmem_to_hbm [thread:$0]  %s30, 128, %s32, [#allocation3]
    $region13: #{tpu_custom_call.1} parent=1 // pred_fallthru
      _
    // Predicated region
    $region14: #{tpu_custom_call.1} parent=1 // pred_check
      _
    $region15: #{tpu_custom_call.1} parent=1 // pred_check_branch
      %36 = sbr.rel (0) target = $region17
    $region16: #{tpu_custom_call.1} parent=1 // pred_region
      %38 = dma.done [#allocation3], 128
    $region17: #{tpu_custom_call.1} parent=1 // pred_fallthru
      _
    %39 = vsyncpa [#allocation3], 1

</llo_original>
